<compile_context>
chip_gen: v6e
topology: v6e:2x2x1
jax: 0.10.0
libtpu: 0.0.40
codegen_flags: <defaults>
</compile_context>

<pallas_src>
import math

import jax
import jax.numpy as jnp
from jax import lax
from jax.experimental import pallas as pl
from jax.experimental.pallas import tpu as pltpu


# ----------------------------------------------------------------------------
# Focal loss kernel (CenterNet _neg_loss applied to _sigmoid(hm))
# ----------------------------------------------------------------------------
_LOG_EPS = math.log(1e-4)          # log of the lower sigmoid clamp
_LOG_1M_EPS = math.log(1.0 - 1e-4)  # log of the upper sigmoid clamp


def _focal_kernel(x_ref, g_ref, out_ref):
    """One (tile_rows, lane) block -> (8, 128) partial-sum tile.

    out tile layout: [0,0]=pos_loss_sum, [0,1]=neg_loss_sum, [0,2]=num_pos.
    """
    x = x_ref[...].astype(jnp.float32)   # raw 'hm' logits
    g = g_ref[...].astype(jnp.float32)   # gt heatmap (padded entries == 2.0)

    # log-sigmoid reformulation (stable, 1 exp + 1 log + 1 approx recip):
    #   t = exp(-|x|);  log(sigmoid(x)) = min(x,0) - log(1+t)
    #                   log(1-sigmoid(x)) = -max(x,0) - log(1+t)
    t = jnp.exp(-jnp.abs(x))
    log1pt = jnp.log(1.0 + t)
    log_p = jnp.clip(jnp.minimum(x, 0.0) - log1pt, _LOG_EPS, _LOG_1M_EPS)
    log_1mp = jnp.clip(-jnp.maximum(x, 0.0) - log1pt, _LOG_EPS, _LOG_1M_EPS)
    p = jnp.where(x >= 0.0, 1.0, t) * pl.reciprocal(1.0 + t, approx=True)
    p = jnp.clip(p, 1e-4, 1.0 - 1e-4)

    pos = (g == 1.0).astype(jnp.float32)
    neg = (g < 1.0).astype(jnp.float32)          # padded g==2.0 -> pos=neg=0
    one_m_g = 1.0 - g
    neg_w = (one_m_g * one_m_g) * (one_m_g * one_m_g)
    one_m_p = 1.0 - p

    pos_loss = log_p * (one_m_p * one_m_p) * pos
    neg_loss = log_1mp * (p * p) * neg_w * neg

    pos_sum = jnp.sum(pos_loss)
    neg_sum = jnp.sum(neg_loss)
    num_pos = jnp.sum(pos)

    row_i = lax.broadcasted_iota(jnp.int32, (8, 128), 0)
    lane_i = lax.broadcasted_iota(jnp.int32, (8, 128), 1)
    vals = jnp.where((row_i == 0) & (lane_i == 0), pos_sum,
            jnp.where((row_i == 0) & (lane_i == 1), neg_sum,
             jnp.where((row_i == 0) & (lane_i == 2), num_pos, 0.0)))
    out_ref[0, :, :] = vals


def focal_loss(hm_logits, hm_gt, *, lane=512, max_rows_per_block=1024):
    """CenterNet focal loss on raw logits (sigmoid + clamp applied in-kernel)."""
    n = hm_logits.size
    x = hm_logits.reshape(-1)            # contiguous reshape: no data movement
    g = hm_gt.reshape(-1)

    rows = -(-n // lane)
    if rows <= max_rows_per_block:
        tile_rows = rows                 # single block, equal to full dim
        n_blocks = 1
    else:
        tile_rows = max_rows_per_block   # multiple of 8
        n_blocks = -(-rows // tile_rows)
    rows_padded = n_blocks * tile_rows
    pad = rows_padded * lane - n
    if pad:
        # gt padded with 2.0 -> pos==0 and neg==0 -> zero loss contribution.
        x = jnp.pad(x, (0, pad))
        g = jnp.pad(g, (0, pad), constant_values=2.0)

    x2 = x.reshape(rows_padded, lane)
    g2 = g.reshape(rows_padded, lane)

    partials = pl.pallas_call(
        _focal_kernel,
        out_shape=jax.ShapeDtypeStruct((n_blocks, 8, 128), jnp.float32),
        grid=(n_blocks,),
        in_specs=[pl.BlockSpec((tile_rows, lane), lambda i: (i, 0)),
                  pl.BlockSpec((tile_rows, lane), lambda i: (i, 0))],
        out_specs=pl.BlockSpec((1, 8, 128), lambda i: (i, 0, 0)),
        compiler_params=pltpu.CompilerParams(
            dimension_semantics=("parallel",),
            vmem_limit_bytes=32 * 1024 * 1024),
    )(x2, g2)

    pos_sum = jnp.sum(partials[:, 0, 0])
    neg_sum = jnp.sum(partials[:, 0, 1])
    num_pos = jnp.sum(partials[:, 0, 2])
    # if num_pos == 0: loss = -neg_loss else: loss = -(pos + neg) / num_pos
    return jnp.where(num_pos > 0,
                     -(pos_sum + neg_sum) / jnp.maximum(num_pos, 1.0),
                     -neg_sum)


# ----------------------------------------------------------------------------
# Fused RegL1Loss kernel: dynamic row gather at `ind`, masked L1 ('sum')
# ----------------------------------------------------------------------------
def _make_regl1_kernel(head_channels):
    """Returns a kernel computing per-head masked-L1 partial sums.

    Kernel args:
      ind_ref  : (B, K)        int32 SMEM  flattened spatial indices (h*W + w)
      mask_ref : (B, K)        f32   SMEM  reg_mask
      feat_ref : (1, HW, Ctot) VMEM  channels-last feature block (batch b)
      tgt_ref  : (1, K, Ctot)  VMEM  regression targets (batch b)
      out_ref  : (H,)          f32   SMEM  per-head sum of |pred-tgt|*mask
    """
    num_heads = len(head_channels)
    c_start = []
    c0 = 0
    for ch in head_channels:
        c_start.append(c0)
        c0 += ch

    def kernel(ind_ref, mask_ref, feat_ref, tgt_ref, out_ref):
        b = pl.program_id(0)

        @pl.when(b == 0)
        def _():
            for h in range(num_heads):
                out_ref[h] = jnp.float32(0.0)

        K = tgt_ref.shape[1]

        def body(k, carry):
            idx = ind_ref[b, k]
            m = mask_ref[b, k].astype(jnp.float32)
            pred = feat_ref[0, pl.ds(idx, 1), :].astype(jnp.float32)  # (1, Ctot)
            trow = tgt_ref[0, pl.ds(k, 1), :].astype(jnp.float32)     # (1, Ctot)
            diff = jnp.abs(pred - trow) * m      # == |pred*m - tgt*m| for m>=0
            new = []
            for h in range(num_heads):
                s = jnp.sum(diff[:, c_start[h]:c_start[h] + head_channels[h]])
                new.append(carry[h] + s)
            return tuple(new)

        init = tuple(jnp.zeros((), jnp.float32) for _ in range(num_heads))
        totals = lax.fori_loop(0, K, body, init)
        for h in range(num_heads):
            out_ref[h] = out_ref[h] + totals[h]

    return kernel


def fused_reg_l1_loss(feats_nchw, targets, reg_mask, ind):
    """RegL1Loss for one or more heads sharing ind/reg_mask (fused kernel).

    feats_nchw : list of (B, C_h, H, W) model outputs
    targets    : list of (B, K, C_h) regression targets
    Returns a list of per-head losses.
    """
    B, _, H, W = feats_nchw[0].shape
    K = ind.shape[1]
    head_channels = tuple(int(f.shape[1]) for f in feats_nchw)
    c_tot = sum(head_channels)

    # Channels-last + concat along C (glue).
    # TODO(synk): have the model emit these heads channels-last to avoid this
    # HBM round-trip, or gather directly from NCHW inside the kernel.
    feat = jnp.concatenate(
        [jnp.transpose(f, (0, 2, 3, 1)).reshape(B, H * W, f.shape[1])
         for f in feats_nchw], axis=-1)
    tgt = jnp.concatenate(list(targets), axis=-1)

    kernel = _make_regl1_kernel(head_channels)
    sums = pl.pallas_call(
        kernel,
        out_shape=jax.ShapeDtypeStruct((len(head_channels),), jnp.float32),
        grid=(B,),
        in_specs=[pl.BlockSpec(memory_space=pltpu.MemorySpace.SMEM),
                  pl.BlockSpec(memory_space=pltpu.MemorySpace.SMEM),
                  pl.BlockSpec((1, H * W, c_tot), lambda b: (b, 0, 0)),
                  pl.BlockSpec((1, K, c_tot), lambda b: (b, 0, 0))],
        out_specs=pl.BlockSpec(memory_space=pltpu.MemorySpace.SMEM),
        compiler_params=pltpu.CompilerParams(
            dimension_semantics=("arbitrary",)),
    )(ind.astype(jnp.int32), reg_mask.astype(jnp.float32), feat, tgt)

    mask_sum = jnp.sum(reg_mask.astype(jnp.float32))
    return [sums[h] / (mask_sum * float(ch) + 1e-4)
            for h, ch in enumerate(head_channels)]


# ----------------------------------------------------------------------------
# CtdetLoss.forward
# ----------------------------------------------------------------------------
def ctdet_loss(outputs, batch, opt):
    # TODO(synk): only the opt.mse_loss == False path is implemented
    # (sigmoid + clamp applied inside the focal kernel), matching the test opt.
    num_stacks = opt['num_stacks']
    hm_loss = jnp.float32(0.0)
    wh_loss = jnp.float32(0.0)
    off_loss = jnp.float32(0.0)
    for s in range(num_stacks):
        output = outputs[s]
        hm_loss = hm_loss + focal_loss(output['hm'], batch['hm']) / num_stacks

        feats, tgts, tags = [], [], []
        if opt['wh_weight'] > 0:
            feats.append(output['wh']); tgts.append(batch['wh']); tags.append('wh')
        if opt['reg_offset'] and opt['off_weight'] > 0:
            feats.append(output['reg']); tgts.append(batch['reg']); tags.append('off')
        if feats:
            losses = fused_reg_l1_loss(feats, tgts, batch['reg_mask'], batch['ind'])
            for tag, l in zip(tags, losses):
                if tag == 'wh':
                    # NOTE: torch code uses '=' (not '+='); reproduced verbatim
                    wh_loss = l / num_stacks
                else:
                    off_loss = off_loss + l / num_stacks

    loss = (opt['hm_weight'] * hm_loss + opt['wh_weight'] * wh_loss +
            opt['off_weight'] * off_loss)
    loss_stats = {'loss': loss, 'hm_loss': hm_loss,
                  'wh_loss': wh_loss, 'off_loss': off_loss}
    return loss, loss_stats


# ----------------------------------------------------------------------------
# Pure-JAX reference (for correctness check)
# ----------------------------------------------------------------------------
def _focal_ref(logits, gt):
    p = jnp.clip(jax.nn.sigmoid(logits), 0.0001, 1.0 - 0.0001)
    pos = (gt == 1.0).astype(jnp.float32)
    neg = (gt < 1.0).astype(jnp.float32)
    neg_w = (1.0 - gt) ** 4
    pos_loss = jnp.sum(jnp.log(p) * (1.0 - p) ** 2 * pos)
    neg_loss = jnp.sum(jnp.log(1.0 - p) * p ** 2 * neg_w * neg)
    num_pos = jnp.sum(pos)
    return jnp.where(num_pos > 0,
                     -(pos_loss + neg_loss) / jnp.maximum(num_pos, 1.0),
                     -neg_loss)


def _regl1_ref(feat_nchw, mask, ind, tgt):
    B, C, H, W = feat_nchw.shape
    f = jnp.transpose(feat_nchw, (0, 2, 3, 1)).reshape(B, H * W, C)
    pred = jnp.take_along_axis(
        f, jnp.broadcast_to(ind[:, :, None].astype(jnp.int32),
                            (B, ind.shape[1], C)), axis=1)
    m = mask[:, :, None].astype(jnp.float32)
    l1 = jnp.sum(jnp.abs(pred * m - tgt * m))
    return l1 / (jnp.sum(mask) * C + 1e-4)


# ----------------------------------------------------------------------------
if __name__ == "__main__":
    key = jax.random.PRNGKey(0)
    B, C_HM, H, W, K = 2, 4, 16, 16, 8
    k1, k2, k3, k4, k5, k6, k7 = jax.random.split(key, 7)

    # model outputs (logits / raw regressions)
    hm_out = jax.random.normal(k1, (B, C_HM, H, W), jnp.float32)
    wh_out = jax.random.normal(k2, (B, 2, H, W), jnp.float32)
    reg_out = jax.random.normal(k3, (B, 2, H, W), jnp.float32)

    # ground-truth heatmap in [0, 0.9) with a few exact-1.0 peaks
    hm_gt = jax.random.uniform(k4, (B, C_HM, H, W), jnp.float32) * 0.9
    hm_gt = hm_gt.at[0, 0, 3, 5].set(1.0)
    hm_gt = hm_gt.at[0, 1, 10, 2].set(1.0)
    hm_gt = hm_gt.at[1, 2, 7, 7].set(1.0)

    ind = jax.random.randint(k5, (B, K), 0, H * W, dtype=jnp.int32)
    reg_mask = (jnp.arange(K)[None, :] < jnp.array([[5], [3]])).astype(jnp.float32)
    wh_gt = jax.random.uniform(k6, (B, K, 2), jnp.float32) * 10.0
    reg_gt = jax.random.uniform(k7, (B, K, 2), jnp.float32)

    opt = dict(num_stacks=1, mse_loss=False, reg_offset=True,
               hm_weight=1.0, wh_weight=0.1, off_weight=1.0)

    outputs = [{'hm': hm_out, 'wh': wh_out, 'reg': reg_out}]
    batch = {'hm': hm_gt, 'reg_mask': reg_mask, 'ind': ind,
             'wh': wh_gt, 'reg': reg_gt}

    loss, stats = ctdet_loss(outputs, batch, opt)
    loss = jax.block_until_ready(loss)

    # references
    hm_ref = _focal_ref(hm_out, hm_gt) / opt['num_stacks']
    wh_ref = _regl1_ref(wh_out, reg_mask, ind, wh_gt) / opt['num_stacks']
    off_ref = _regl1_ref(reg_out, reg_mask, ind, reg_gt) / opt['num_stacks']
    loss_ref = (opt['hm_weight'] * hm_ref + opt['wh_weight'] * wh_ref +
                opt['off_weight'] * off_ref)
    loss_ref = jax.block_until_ready(loss_ref)

    assert jnp.isfinite(loss), "loss is not finite"
    assert jnp.allclose(stats['hm_loss'], hm_ref, rtol=1e-2, atol=1e-2), \
        (stats['hm_loss'], hm_ref)
    assert jnp.allclose(stats['wh_loss'], wh_ref, rtol=1e-2, atol=1e-2), \
        (stats['wh_loss'], wh_ref)
    assert jnp.allclose(stats['off_loss'], off_ref, rtol=1e-2, atol=1e-2), \
        (stats['off_loss'], off_ref)
    assert jnp.allclose(loss, loss_ref, rtol=1e-2, atol=1e-2), (loss, loss_ref)

    print("KERNEL_OK")
</pallas_src>

<mosaic_0001>
module attributes {stable_mosaic.version = 11 : i64} {
  func.func @_focal_kernel(%arg0: i32, %arg1: memref<4x512xf32, #tpu.memory_space<vmem>>, %arg2: memref<4x512xf32, #tpu.memory_space<vmem>>, %arg3: memref<1x8x128xf32, #tpu.memory_space<vmem>>) attributes {dimension_semantics = [#tpu.dimension_semantics<parallel>], iteration_bounds = array<i64: 1>, scalar_prefetch = 0 : i64, scratch_operands = 0 : i64, tpu.core_type = #tpu.core_type<tc>, window_params = [{transform_indices = @transform_0, window_bounds = array<i64: 4, 512>}, {transform_indices = @transform_1, window_bounds = array<i64: 4, 512>}, {transform_indices = @transform_2, window_bounds = array<i64: 1, 8, 128>}]} {
    %c0 = arith.constant 0 : index
    %c0_0 = arith.constant 0 : index
    %0 = vector.load %arg1[%c0, %c0_0] : memref<4x512xf32, #tpu.memory_space<vmem>>, vector<4x512xf32>
    %c0_1 = arith.constant 0 : index
    %c0_2 = arith.constant 0 : index
    %1 = vector.load %arg2[%c0_1, %c0_2] : memref<4x512xf32, #tpu.memory_space<vmem>>, vector<4x512xf32>
    %2 = math.absf %0 : vector<4x512xf32>
    %cst = arith.constant 0.000000e+00 : f32
    %3 = vector.broadcast %cst : f32 to vector<4x512xf32>
    %4 = arith.subf %3, %2 : vector<4x512xf32>
    %5 = math.exp %4 : vector<4x512xf32>
    %cst_3 = arith.constant 1.000000e+00 : f32
    %6 = vector.broadcast %cst_3 : f32 to vector<4x512xf32>
    %7 = arith.addf %6, %5 : vector<4x512xf32>
    %8 = math.log %7 : vector<4x512xf32>
    %cst_4 = arith.constant 0.000000e+00 : f32
    %9 = vector.broadcast %cst_4 : f32 to vector<4x512xf32>
    %10 = arith.minimumf %0, %9 : vector<4x512xf32>
    %11 = arith.subf %10, %8 : vector<4x512xf32>
    %cst_5 = arith.constant -9.21034049 : f32
    %cst_6 = arith.constant -1.000050e-04 : f32
    %12 = vector.broadcast %cst_5 : f32 to vector<4x512xf32>
    %13 = arith.maximumf %12, %11 : vector<4x512xf32>
    %14 = vector.broadcast %cst_6 : f32 to vector<4x512xf32>
    %15 = arith.minimumf %14, %13 : vector<4x512xf32>
    %cst_7 = arith.constant 0.000000e+00 : f32
    %16 = vector.broadcast %cst_7 : f32 to vector<4x512xf32>
    %17 = arith.maximumf %0, %16 : vector<4x512xf32>
    %cst_8 = arith.constant 0.000000e+00 : f32
    %18 = vector.broadcast %cst_8 : f32 to vector<4x512xf32>
    %19 = arith.subf %18, %17 : vector<4x512xf32>
    %20 = arith.subf %19, %8 : vector<4x512xf32>
    %cst_9 = arith.constant -9.21034049 : f32
    %cst_10 = arith.constant -1.000050e-04 : f32
    %21 = vector.broadcast %cst_9 : f32 to vector<4x512xf32>
    %22 = arith.maximumf %21, %20 : vector<4x512xf32>
    %23 = vector.broadcast %cst_10 : f32 to vector<4x512xf32>
    %24 = arith.minimumf %23, %22 : vector<4x512xf32>
    %cst_11 = arith.constant 0.000000e+00 : f32
    %25 = vector.broadcast %cst_11 : f32 to vector<4x512xf32>
    %26 = arith.cmpf oge, %0, %25 : vector<4x512xf32>
    %cst_12 = arith.constant 1.000000e+00 : f32
    %27 = vector.broadcast %cst_12 : f32 to vector<4x512xf32>
    %28 = arith.select %26, %27, %5 : vector<4x512xi1>, vector<4x512xf32>
    %cst_13 = arith.constant 1.000000e+00 : f32
    %29 = vector.broadcast %cst_13 : f32 to vector<4x512xf32>
    %30 = arith.addf %29, %5 : vector<4x512xf32>
    %31 = tpu.reciprocal %30 {approx = true} : vector<4x512xf32> -> vector<4x512xf32>
    %32 = arith.mulf %28, %31 : vector<4x512xf32>
    %cst_14 = arith.constant 9.99999974E-5 : f32
    %cst_15 = arith.constant 0.999899983 : f32
    %33 = vector.broadcast %cst_14 : f32 to vector<4x512xf32>
    %34 = arith.maximumf %33, %32 : vector<4x512xf32>
    %35 = vector.broadcast %cst_15 : f32 to vector<4x512xf32>
    %36 = arith.minimumf %35, %34 : vector<4x512xf32>
    %cst_16 = arith.constant 1.000000e+00 : f32
    %37 = vector.broadcast %cst_16 : f32 to vector<4x512xf32>
    %38 = arith.cmpf oeq, %1, %37 : vector<4x512xf32>
    %39 = arith.extui %38 : vector<4x512xi1> to vector<4x512xi32>
    %40 = arith.sitofp %39 : vector<4x512xi32> to vector<4x512xf32>
    %cst_17 = arith.constant 1.000000e+00 : f32
    %41 = vector.broadcast %cst_17 : f32 to vector<4x512xf32>
    %42 = arith.cmpf olt, %1, %41 : vector<4x512xf32>
    %43 = arith.extui %42 : vector<4x512xi1> to vector<4x512xi32>
    %44 = arith.sitofp %43 : vector<4x512xi32> to vector<4x512xf32>
    %cst_18 = arith.constant 1.000000e+00 : f32
    %45 = vector.broadcast %cst_18 : f32 to vector<4x512xf32>
    %46 = arith.subf %45, %1 : vector<4x512xf32>
    %47 = arith.mulf %46, %46 : vector<4x512xf32>
    %48 = arith.mulf %46, %46 : vector<4x512xf32>
    %49 = arith.mulf %47, %48 : vector<4x512xf32>
    %cst_19 = arith.constant 1.000000e+00 : f32
    %50 = vector.broadcast %cst_19 : f32 to vector<4x512xf32>
    %51 = arith.subf %50, %36 : vector<4x512xf32>
    %52 = arith.mulf %51, %51 : vector<4x512xf32>
    %53 = arith.mulf %15, %52 : vector<4x512xf32>
    %54 = arith.mulf %53, %40 : vector<4x512xf32>
    %55 = arith.mulf %36, %36 : vector<4x512xf32>
    %56 = arith.mulf %24, %55 : vector<4x512xf32>
    %57 = arith.mulf %56, %49 : vector<4x512xf32>
    %58 = arith.mulf %57, %44 : vector<4x512xf32>
    %59 = vector.shape_cast %54 : vector<4x512xf32> to vector<1x4x512xf32>
    %cst_20 = arith.constant dense<0.000000e+00> : vector<1xf32>
    %60 = vector.multi_reduction <add>, %59, %cst_20 [1, 2] : vector<1x4x512xf32> to vector<1xf32>
    %61 = vector.shape_cast %60 : vector<1xf32> to vector<1x1x1xf32>
    %62 = vector.extract %61[0, 0, 0] : f32 from vector<1x1x1xf32>
    %63 = vector.shape_cast %58 : vector<4x512xf32> to vector<1x4x512xf32>
    %cst_21 = arith.constant dense<0.000000e+00> : vector<1xf32>
    %64 = vector.multi_reduction <add>, %63, %cst_21 [1, 2] : vector<1x4x512xf32> to vector<1xf32>
    %65 = vector.shape_cast %64 : vector<1xf32> to vector<1x1x1xf32>
    %66 = vector.extract %65[0, 0, 0] : f32 from vector<1x1x1xf32>
    %67 = vector.shape_cast %40 : vector<4x512xf32> to vector<1x4x512xf32>
    %cst_22 = arith.constant dense<0.000000e+00> : vector<1xf32>
    %68 = vector.multi_reduction <add>, %67, %cst_22 [1, 2] : vector<1x4x512xf32> to vector<1xf32>
    %69 = vector.shape_cast %68 : vector<1xf32> to vector<1x1x1xf32>
    %70 = vector.extract %69[0, 0, 0] : f32 from vector<1x1x1xf32>
    %71 = tpu.iota {dimensions = array<i32: 0>} : vector<8x128xi32>
    %72 = tpu.iota {dimensions = array<i32: 1>} : vector<8x128xi32>
    %c0_i32 = arith.constant 0 : i32
    %73 = vector.broadcast %c0_i32 : i32 to vector<8x128xi32>
    %74 = arith.cmpi eq, %71, %73 : vector<8x128xi32>
    %c0_i32_23 = arith.constant 0 : i32
    %75 = vector.broadcast %c0_i32_23 : i32 to vector<8x128xi32>
    %76 = arith.cmpi eq, %72, %75 : vector<8x128xi32>
    %77 = arith.andi %74, %76 : vector<8x128xi1>
    %c0_i32_24 = arith.constant 0 : i32
    %78 = vector.broadcast %c0_i32_24 : i32 to vector<8x128xi32>
    %79 = arith.cmpi eq, %71, %78 : vector<8x128xi32>
    %c1_i32 = arith.constant 1 : i32
    %80 = vector.broadcast %c1_i32 : i32 to vector<8x128xi32>
    %81 = arith.cmpi eq, %72, %80 : vector<8x128xi32>
    %82 = arith.andi %79, %81 : vector<8x128xi1>
    %c0_i32_25 = arith.constant 0 : i32
    %83 = vector.broadcast %c0_i32_25 : i32 to vector<8x128xi32>
    %84 = arith.cmpi eq, %71, %83 : vector<8x128xi32>
    %c2_i32 = arith.constant 2 : i32
    %85 = vector.broadcast %c2_i32 : i32 to vector<8x128xi32>
    %86 = arith.cmpi eq, %72, %85 : vector<8x128xi32>
    %87 = arith.andi %84, %86 : vector<8x128xi1>
    %cst_26 = arith.constant 0.000000e+00 : f32
    %88 = vector.broadcast %70 : f32 to vector<8x128xf32>
    %89 = vector.broadcast %cst_26 : f32 to vector<8x128xf32>
    %90 = arith.select %87, %88, %89 : vector<8x128xi1>, vector<8x128xf32>
    %91 = vector.broadcast %66 : f32 to vector<8x128xf32>
    %92 = arith.select %82, %91, %90 : vector<8x128xi1>, vector<8x128xf32>
    %93 = vector.broadcast %62 : f32 to vector<8x128xf32>
    %94 = arith.select %77, %93, %92 : vector<8x128xi1>, vector<8x128xf32>
    %c0_27 = arith.constant 0 : index
    %c0_28 = arith.constant 0 : index
    %c0_29 = arith.constant 0 : index
    %95 = vector.load %arg3[%c0_27, %c0_28, %c0_29] : memref<1x8x128xf32, #tpu.memory_space<vmem>>, vector<1x8x128xf32>
    %96 = vector.shape_cast %95 : vector<1x8x128xf32> to vector<8x128xf32>
    %97 = vector.shape_cast %94 : vector<8x128xf32> to vector<1x8x128xf32>
    tpu.vector_store %arg3[%c0_27, %c0_28, %c0_29], %97 {strides = array<i32>} : memref<1x8x128xf32, #tpu.memory_space<vmem>>, vector<1x8x128xf32>,
    return
  }
  func.func @transform_0(%arg0: i32) -> (i32, i32) {
    %c0_i32 = arith.constant 0 : i32
    %c0_i32_0 = arith.constant 0 : i32
    return %arg0, %c0_i32 : i32, i32
  }
  func.func @transform_1(%arg0: i32) -> (i32, i32) {
    %c0_i32 = arith.constant 0 : i32
    %c0_i32_0 = arith.constant 0 : i32
    return %arg0, %c0_i32 : i32, i32
  }
  func.func @transform_2(%arg0: i32) -> (i32, i32, i32) {
    %c0_i32 = arith.constant 0 : i32
    %c0_i32_0 = arith.constant 0 : i32
    %c0_i32_1 = arith.constant 0 : i32
    return %arg0, %c0_i32, %c0_i32_0 : i32, i32, i32
  }
}

</mosaic_0001>

<llo_original>
// kernel: tpu_custom_call.1
$region0: #{tpu_custom_call.1}
  #allocation0 [shape = 'u32[]', space=smem, size = 0x4, offset = 0x4, fixed_abs, tag = 'smem constant byte address 0x4 - core index']
  #allocation1 [shape = 'u32[144,128]{1,0:T(1,128)}', space=vmem, size = 0x12000, scoped, tag = 'internal scratch']
  %s0 = inlined_call_operand.hbm [shape: f32[4,512], index: 0, kind: input, shape index: {}]
  %s1 = inlined_call_operand.hbm [shape: f32[4,512], index: 1, kind: input, shape index: {}]
  %s2 = inlined_call_operand.hbm [shape: f32[1,8,128], index: 2, kind: output, shape index: {}]
  %s3 = sld [smem:[#allocation0]]
  $region26: #{tpu_custom_call.1} parent=0
    _
  %s5 = ssub.s32 1, %s3
  %s6 = scalar_select 0, %s5, %s3
  $region1: #{tpu_custom_call.1} parent=0
    #allocation2 [shape = 'u8[8192]{0}', space=vmem, size = 0x2000, scoped, tag = 'input window, operand 0, single buffered']
    #allocation3 [shape = 's32[1]{0}', space=sflag, size = 0x4, scoped, tag = 'scoped memory for tpu_custom_call.1']
    #allocation4 [shape = 's32[1]{0}', space=sflag, size = 0x4, scoped, tag = 'scoped memory for tpu_custom_call.1']
    #allocation5 [shape = 'u8[8192]{0}', space=vmem, size = 0x2000, scoped, tag = 'input window, operand 1, single buffered']
    #allocation6 [shape = 's32[1]{0}', space=sflag, size = 0x4, scoped, tag = 'scoped memory for tpu_custom_call.1']
    #allocation7 [shape = 'u8[4096]{0}', space=vmem, size = 0x1000, scoped, tag = 'output window, operand 0, single buffered']
    %7 = vsyncpa [#allocation3], 0
    %8 = vsyncpa [#allocation6], 0
    %9 = vsyncpa [#allocation4], 0
    // Predicated region
    $region2: #{tpu_custom_call.1} parent=1 // pred_check
      _
    $region3: #{tpu_custom_call.1} parent=1 // pred_check_branch
      %11 = sbr.rel (0) target = $region5
    $region4: #{tpu_custom_call.1} parent=1 // pred_region
      %s13 = ssub.s32 256, 256
      %14 = vsyncadd [#allocation3], %s13
      %s16 = sshll.u32 [#allocation2], 4
      %s17 = int_to_ptr.vmem [resolvable:$true] %s16
      %19 = dma.hbm_to_vmem [thread:$0]  %s0, 256, %s17, [#allocation3]
    $region5: #{tpu_custom_call.1} parent=1 // pred_fallthru
      _
    // Predicated region
    $region6: #{tpu_custom_call.1} parent=1 // pred_check
      _
    $region7: #{tpu_custom_call.1} parent=1 // pred_check_branch
      %21 = sbr.rel (0) target = $region9
    $region8: #{tpu_custom_call.1} parent=1 // pred_region
      %s23 = ssub.s32 256, 256
      %24 = vsyncadd [#allocation6], %s23
      %s26 = sshll.u32 [#allocation5], 4
      %s27 = int_to_ptr.vmem [resolvable:$true] %s26
      %29 = dma.hbm_to_vmem [thread:$0]  %s1, 256, %s27, [#allocation6]
    $region9: #{tpu_custom_call.1} parent=1 // pred_fallthru
      _
    // Predicated region
    $region10: #{tpu_custom_call.1} parent=1 // pred_check
      _
    $region11: #{tpu_custom_call.1} parent=1 // pred_check_branch
      %31 = sbr.rel (0) target = $region13
    $region12: #{tpu_custom_call.1} parent=1 // pred_region
      %32 = dma.done [#allocation3], 256
    $region13: #{tpu_custom_call.1} parent=1 // pred_fallthru
      _
    // Predicated region
    $region14: #{tpu_custom_call.1} parent=1 // pred_check
      _
    $region15: #{tpu_custom_call.1} parent=1 // pred_check_branch
      %34 = sbr.rel (0) target = $region17
    $region16: #{tpu_custom_call.1} parent=1 // pred_region
      %35 = dma.done [#allocation6], 256
    $region17: #{tpu_custom_call.1} parent=1 // pred_fallthru
      _
    %v36 = vld [vmem:[#allocation2] sm:$0xff]
    %v37 = vld [vmem:[#allocation2 + $0x8] sm:$0xff]
    %v38 = vld [vmem:[#allocation5] sm:$0xff]
    %v39 = vld [vmem:[#allocation5 + $0x8] sm:$0xff]
    %v40 = vand.u32 2147483647, %v36
    %v41 = vand.u32 2147483647, %v37
    %v42 = vsub.f32 0.0, %v40
    %v43 = vsub.f32 0.0, %v41
    %v44 = vmul.f32 %v42, 1.442695
    %v45 = vpow.pop %v44
    %v46 = vmul.f32 %v43, 1.442695
    %v47 = vpow.pop %v46
    %v48 = vadd.f32 %v45, 1.0
    %v49 = vadd.f32 %v47, 1.0
    %v50 = vlog2.pop %v48
    %v51 = vmul.f32 %v50, 0.6931472
    %v52 = vlog2.pop %v49
    %v53 = vmul.f32 %v52, 0.6931472
    %v54 = vmin.f32 %v36, 0.0
    %v55 = vmin.f32 %v37, 0.0
    %v56 = vsub.f32 %v54, %v51
    %v57 = vsub.f32 %v55, %v53
    %v58 = vmax.f32 %v56, -9.2103405
    %v59 = vmax.f32 %v57, -9.2103405
    %v60 = vmin.f32 %v58, -0.000100005
    %v61 = vmin.f32 %v59, -0.000100005
    %v62 = vmax.f32 %v36, 0.0
    %v63 = vmax.f32 %v37, 0.0
    %v64 = vsub.f32 0.0, %v62
    %v65 = vsub.f32 0.0, %v63
    %v66 = vsub.f32 %v64, %v51
    %v67 = vsub.f32 %v65, %v53
    %v68 = vmax.f32 %v66, -9.2103405
    %v69 = vmax.f32 %v67, -9.2103405
    %v70 = vmin.f32 %v68, -0.000100005
    %v71 = vmin.f32 %v69, -0.000100005
    %vm72 = vcmp.ge.f32.partialorder %v36, 0.0
    %vm73 = vcmp.ge.f32.partialorder %v37, 0.0
    %v74 = vsel %vm72, 1.0, %v45
    %v75 = vsel %vm73, 1.0, %v47
    %v76 = vrcp.pop %v48
    %v77 = vrcp.pop %v49
    %v78 = vmul.f32 %v74, %v76
    %v79 = vmul.f32 %v75, %v77
    %v80 = vmax.f32 %v78, 0.0001
    %v81 = vmax.f32 %v79, 0.0001
    %v82 = vmin.f32 %v80, 0.9999
    %v83 = vmin.f32 %v81, 0.9999
    %vm84 = vcmp.eq.f32.partialorder %v38, 1.0
    %vm85 = vcmp.eq.f32.partialorder %v39, 1.0
    %v86 = vsel %vm84, 1, 0
    %v87 = vsel %vm85, 1, 0
    %v88 = vcvt.s32.f32 %v86
    %v89 = vcvt.s32.f32 %v87
    %vm90 = vcmp.lt.f32.partialorder %v38, 1.0
    %vm91 = vcmp.lt.f32.partialorder %v39, 1.0
    %v92 = vsel %vm90, 1, 0
    %v93 = vsel %vm91, 1, 0
    %v94 = vcvt.s32.f32 %v92
    %v95 = vcvt.s32.f32 %v93
    %v96 = vsub.f32 1.0, %v38
    %v97 = vsub.f32 1.0, %v39
    %v98 = vmul.f32 %v96, %v96
    %v99 = vmul.f32 %v97, %v97
    %v100 = vmul.f32 %v98, %v98
    %v101 = vmul.f32 %v99, %v99
    %v102 = vsub.f32 1.0, %v82
    %v103 = vsub.f32 1.0, %v83
    %v104 = vmul.f32 %v102, %v102
    %v105 = vmul.f32 %v103, %v103
    %v106 = vmul.f32 %v60, %v104
    %v107 = vmul.f32 %v61, %v105
    %v108 = vmul.f32 %v106, %v88
    %v109 = vmul.f32 %v107, %v89
    %v110 = vmul.f32 %v82, %v82
    %v111 = vmul.f32 %v83, %v83
    %v112 = vmul.f32 %v70, %v110
    %v113 = vmul.f32 %v71, %v111
    %v114 = vmul.f32 %v112, %v100
    %v115 = vmul.f32 %v113, %v101
    %v116 = vmul.f32 %v114, %v94
    %v117 = vmul.f32 %v115, %v95
    %v120 = vcombine.high %v108, %v108
    %v121 = vcombine.high %v109, %v109
    %vm124 = vcmask 1043456
    %v125 = vsel %vm124, %v108, 0.0
    %v126 = vsel %vm124, %v120, 0.0
    %v127 = vadd.f32 %v125, %v126
    %v128 = vsel %vm124, %v109, 0.0
    %v129 = vadd.f32 %v127, %v128
    %v130 = vsel %vm124, %v121, 0.0
    %v131 = vadd.f32 %v129, %v130
    %132 = vadd.xlane.f32.xlu0 %v131
    %v133 = vpop.xlane.xlu0 %132
    %v134 = vrot.slane %v133, 4
    %v135 = vadd.f32 %v133, %v134
    %v136 = vrot.slane %v135, 2
    %v137 = vadd.f32 %v135, %v136
    %v138 = vrot.slane %v137, 1
    %v139 = vadd.f32 %v137, %v138
    %s140 = vtos %v139
    %v143 = vcombine.high %v116, %v116
    %v144 = vcombine.high %v117, %v117
    %v147 = vsel %vm124, %v116, 0.0
    %v148 = vsel %vm124, %v143, 0.0
    %v149 = vadd.f32 %v147, %v148
    %v150 = vsel %vm124, %v117, 0.0
    %v151 = vadd.f32 %v149, %v150
    %v152 = vsel %vm124, %v144, 0.0
    %v153 = vadd.f32 %v151, %v152
    %154 = vadd.xlane.f32.xlu0 %v153
    %v155 = vpop.xlane.xlu0 %154
    %v156 = vrot.slane %v155, 4
    %v157 = vadd.f32 %v155, %v156
    %v158 = vrot.slane %v157, 2
    %v159 = vadd.f32 %v157, %v158
    %v160 = vrot.slane %v159, 1
    %v161 = vadd.f32 %v159, %v160
    %s162 = vtos %v161
    %v165 = vcombine.high %v88, %v88
    %v166 = vcombine.high %v89, %v89
    %v169 = vsel %vm124, %v88, 0.0
    %v170 = vsel %vm124, %v165, 0.0
    %v171 = vadd.f32 %v169, %v170
    %v172 = vsel %vm124, %v89, 0.0
    %v173 = vadd.f32 %v171, %v172
    %v174 = vsel %vm124, %v166, 0.0
    %v175 = vadd.f32 %v173, %v174
    %176 = vadd.xlane.f32.xlu0 %v175
    %v177 = vpop.xlane.xlu0 %176
    %v178 = vrot.slane %v177, 4
    %v179 = vadd.f32 %v177, %v178
    %v180 = vrot.slane %v179, 2
    %v181 = vadd.f32 %v179, %v180
    %v182 = vrot.slane %v181, 1
    %v183 = vadd.f32 %v181, %v182
    %s184 = vtos %v183
    %v185 = vlaneseq
    %v186 = vshrl.u32 %v185, 7
    %v187 = vlaneseq
    %v188 = vand.u32 %v187, 127
    %vm189 = vcmp.eq.s32.totalorder %v186, 0
    %vm190 = vcmp.eq.s32.totalorder %v188, 0
    %vm191 = vmand %vm189, %vm190
    %vm192 = vcmp.eq.s32.totalorder %v188, 1
    %vm193 = vmand %vm189, %vm192
    %vm194 = vcmp.eq.s32.totalorder %v188, 2
    %vm195 = vmand %vm189, %vm194
    %v196 = vstv %s184
    %v197 = vsel %vm195, %v196, 0.0
    %v198 = vstv %s162
    %v199 = vsel %vm193, %v198, %v197
    %v200 = vstv %s140
    %v201 = vsel %vm191, %v200, %v199
    %202 = vst [vmem:[#allocation7] sm:$0xff] %v201
    // Predicated region
    $region18: #{tpu_custom_call.1} parent=1 // pred_check
      _
    $region19: #{tpu_custom_call.1} parent=1 // pred_check_branch
      %204 = sbr.rel (0) target = $region21
    $region20: #{tpu_custom_call.1} parent=1 // pred_region
      %s206 = ssub.s32 128, 128
      %207 = vsyncadd [#allocation4], %s206
      %s209 = sshll.u32 [#allocation7], 4
      %s210 = int_to_ptr.vmem [resolvable:$true] %s209
      %212 = dma.vmem_to_hbm [thread:$0]  %s210, 128, %s2, [#allocation4]
    $region21: #{tpu_custom_call.1} parent=1 // pred_fallthru
      _
    // Predicated region
    $region22: #{tpu_custom_call.1} parent=1 // pred_check
      _
    $region23: #{tpu_custom_call.1} parent=1 // pred_check_branch
      %214 = sbr.rel (0) target = $region25
    $region24: #{tpu_custom_call.1} parent=1 // pred_region
      %215 = dma.done [#allocation4], 128
    $region25: #{tpu_custom_call.1} parent=1 // pred_fallthru
      _
    %216 = vsyncpa [#allocation3], 1
    %217 = vsyncpa [#allocation6], 1
    %218 = vsyncpa [#allocation4], 1

</llo_original>
